<compile_context>
chip_gen: v5e
topology: v5e:2x2
jax: 0.10.0
libtpu: 0.0.40
codegen_flags: <defaults>
</compile_context>

<pallas_src>
import jax
import jax.numpy as jnp
from jax.experimental import pallas as pl
from jax.experimental.pallas import tpu as pltpu

NeuronCount = [3, 5, 2]
D_IN, D_HID, D_OUT = NeuronCount


def pinn_kernel(w1_ref, b1_ref, w2_ref, b2_ref, x_ref, o_ref):
    # x_ref: (D_IN, tile_rows, 128) VMEM; o_ref: (D_OUT, tile_rows, 128) VMEM.
    # w1_ref (D_IN, D_HID), b1_ref (D_HID,), w2_ref (D_HID, D_OUT), b2_ref (D_OUT,)
    # live in SMEM; every element is read as a 32-bit scalar.
    xs = [x_ref[k] for k in range(D_IN)]          # dense (tile_rows, 128) blocks

    # Interleave the two layers: as each hidden unit h_j is produced, immediately
    # fold it into the D_OUT output accumulators.  Live set per chunk is just the
    # D_IN inputs, one h, and D_OUT accumulators (no hidden-layer temporaries).
    o_acc = [None] * D_OUT
    for j in range(D_HID):
        acc = xs[0] * w1_ref[0, j] + b1_ref[j]
        for k in range(1, D_IN):
            acc = acc + xs[k] * w1_ref[k, j]
        h = jnp.tanh(acc)                          # EUP slot
        for m in range(D_OUT):
            if j == 0:
                o_acc[m] = h * w2_ref[j, m] + b2_ref[m]
            else:
                o_acc[m] = o_acc[m] + h * w2_ref[j, m]

    for m in range(D_OUT):
        o_ref[m] = o_acc[m].astype(o_ref.dtype)    # full-lane unmasked vst


def _tile_and_pad(rows, max_tile_rows):
    """Pick (tile_rows, padded_rows): large near-equal tiles, minimal tail padding."""
    if rows <= max_tile_rows:
        # Prefer >=2 grid steps so a 2-TC chip (v7x) can shard them, as long as
        # each half is still a legal multiple-of-8 tile.
        if rows >= 16 and rows % 16 == 0:
            return rows // 2, rows
        return rows, rows                          # single full-extent tile (legal)
    n_steps = -(-rows // max_tile_rows)            # cdiv
    tile = -(-rows // n_steps)                     # near-equal split
    tile = ((tile + 7) // 8) * 8                   # multiple of 8 for (8,128) rule
    return tile, tile * n_steps                    # pad only the tail (<1 tile)


def pinn_forward_fm(x_fm, w1, b1, w2, b2, *, max_tile_rows=2048):
    """Feature-major forward (the hot path; no transposes).

    x_fm: (3, N) f32.  w1: (3, 5), b1: (5,), w2: (5, 2), b2: (2,).
    Returns (2, N) f32, feature-major.
    """
    d_in, N = x_fm.shape
    d_hid = w1.shape[1]
    d_out = w2.shape[1]
    assert (d_in, d_hid, d_out) == (D_IN, D_HID, D_OUT)

    rows = pl.cdiv(N, 128)
    tile_rows, rows_p = _tile_and_pad(rows, max_tile_rows)
    n_pad = rows_p * 128
    if n_pad != N:
        x_fm = jnp.pad(x_fm, ((0, 0), (0, n_pad - N)))

    # Row-major reshape (3, n_pad) -> (3, rows_p, 128): pure metadata, no copy.
    x_t = x_fm.reshape(d_in, rows_p, 128)
    grid = (rows_p // tile_rows,)

    smem_spec = pl.BlockSpec(memory_space=pltpu.MemorySpace.SMEM)
    cost = pl.CostEstimate(
        flops=50 * n_pad,              # 30 (3->5) + 20 (5->2) f32 ops per sample
        transcendentals=5 * n_pad,     # tanh per hidden unit
        bytes_accessed=(d_in + d_out) * 4 * n_pad,
    )
    out_t = pl.pallas_call(
        pinn_kernel,
        out_shape=jax.ShapeDtypeStruct((d_out, rows_p, 128), x_fm.dtype),
        grid_spec=pltpu.PrefetchScalarGridSpec(
            num_scalar_prefetch=0,
            grid=grid,
            in_specs=[
                smem_spec,                                                 # W1 (3, 5)
                smem_spec,                                                 # b1 (5,)
                smem_spec,                                                 # W2 (5, 2)
                smem_spec,                                                 # b2 (2,)
                pl.BlockSpec((d_in, tile_rows, 128), lambda i: (0, i, 0)),  # x
            ],
            out_specs=pl.BlockSpec((d_out, tile_rows, 128), lambda i: (0, i, 0)),
        ),
        compiler_params=pltpu.CompilerParams(
            # Independent batch tiles; on v7x this lets the runtime shard grid
            # steps across both TensorCores (consider pltpu.CORE_PARALLEL there).
            dimension_semantics=("parallel",),
            vmem_limit_bytes=32 * 1024 * 1024,
        ),
        cost_estimate=cost,
    )(w1, b1, w2, b2, x_t)

    out_fm = out_t.reshape(d_out, n_pad)           # free reshape
    if n_pad != N:
        out_fm = out_fm[:, :N]                     # drop padded tail
    return out_fm


def pinn_forward(x, w1, b1, w2, b2, **kw):
    """Row-major compatibility wrapper: x (N, 3) -> (N, 2).

    Pays one HBM transpose each way; keep data feature-major upstream and call
    pinn_forward_fm directly in the hot path.
    """
    return pinn_forward_fm(x.T, w1, b1, w2, b2, **kw).T


def init_params(key, neuron_count):
    """Deterministic init mirroring nn.Linear; W stored transposed as (in, out)."""
    params = []
    for i in range(len(neuron_count) - 1):
        fan_in, fan_out = neuron_count[i], neuron_count[i + 1]
        key, kw, kb = jax.random.split(key, 3)
        bound = 1.0 / (fan_in ** 0.5)
        w = jax.random.uniform(kw, (fan_in, fan_out), jnp.float32, -bound, bound)
        b = jax.random.uniform(kb, (fan_out,), jnp.float32, -bound, bound)
        params.append((w, b))
    return params


def reference_forward(x, params):
    h = x
    for w, b in params[:-1]:
        h = jnp.tanh(h @ w + b)
    w, b = params[-1]
    return h @ w + b


if __name__ == "__main__":
    key = jax.random.PRNGKey(0)
    key, kx = jax.random.split(key)

    params = init_params(key, NeuronCount)
    (w1, b1), (w2, b2) = params

    # Hot path: collocation points kept feature-major (3, N) upstream,
    # so no transpose/pad is needed around the kernel.
    N = 2048                                    # rows=16 -> 2 grid steps of 8 rows
    x_fm = jax.random.normal(kx, (D_IN, N), dtype=jnp.float32)

    out_fm = jax.jit(pinn_forward_fm)(x_fm, w1, b1, w2, b2)
    out_fm = jax.block_until_ready(out_fm)
    assert out_fm.shape == (D_OUT, N)
    ref = reference_forward(x_fm.T, params)
    assert jnp.allclose(out_fm.T, ref, atol=1e-5, rtol=1e-5), "feature-major mismatch"

    # Also exercise the row-major compatibility wrapper and the padded-tail path.
    N2 = 1000                                   # not a multiple of 128 -> padding
    key, kx2 = jax.random.split(key)
    x2 = jax.random.normal(kx2, (N2, D_IN), dtype=jnp.float32)
    out2 = jax.block_until_ready(jax.jit(pinn_forward)(x2, w1, b1, w2, b2))
    assert out2.shape == (N2, D_OUT)
    ref2 = reference_forward(x2, params)
    assert jnp.allclose(out2, ref2, atol=1e-5, rtol=1e-5), "row-major mismatch"

    print("KERNEL_OK")
</pallas_src>

<mosaic_0001>
module attributes {stable_mosaic.version = 11 : i64} {
  func.func @pinn_kernel(%arg0: i32, %arg1: memref<3x5xf32, #tpu.memory_space<smem>>, %arg2: memref<5xf32, #tpu.memory_space<smem>>, %arg3: memref<5x2xf32, #tpu.memory_space<smem>>, %arg4: memref<2xf32, #tpu.memory_space<smem>>, %arg5: memref<3x8x128xf32, #tpu.memory_space<vmem>>, %arg6: memref<2x8x128xf32, #tpu.memory_space<vmem>>) attributes {dimension_semantics = [#tpu.dimension_semantics<parallel>], iteration_bounds = array<i64: 2>, scalar_prefetch = 0 : i64, scratch_operands = 0 : i64, tpu.core_type = #tpu.core_type<tc>, window_params = [{transform_indices = @transform_0, window_bounds = array<i64: 3, 5>}, {transform_indices = @transform_1, window_bounds = array<i64: 5>}, {transform_indices = @transform_2, window_bounds = array<i64: 5, 2>}, {transform_indices = @transform_3, window_bounds = array<i64: 2>}, {transform_indices = @transform_4, window_bounds = array<i64: 3, 8, 128>}, {transform_indices = @transform_5, window_bounds = array<i64: 2, 8, 128>}]} {
    %c0 = arith.constant 0 : index
    %c0_0 = arith.constant 0 : index
    %c0_1 = arith.constant 0 : index
    %0 = vector.load %arg5[%c0, %c0_0, %c0_1] : memref<3x8x128xf32, #tpu.memory_space<vmem>>, vector<1x8x128xf32>
    %1 = vector.shape_cast %0 : vector<1x8x128xf32> to vector<8x128xf32>
    %c1 = arith.constant 1 : index
    %c0_2 = arith.constant 0 : index
    %c0_3 = arith.constant 0 : index
    %2 = vector.load %arg5[%c1, %c0_2, %c0_3] : memref<3x8x128xf32, #tpu.memory_space<vmem>>, vector<1x8x128xf32>
    %3 = vector.shape_cast %2 : vector<1x8x128xf32> to vector<8x128xf32>
    %c2 = arith.constant 2 : index
    %c0_4 = arith.constant 0 : index
    %c0_5 = arith.constant 0 : index
    %4 = vector.load %arg5[%c2, %c0_4, %c0_5] : memref<3x8x128xf32, #tpu.memory_space<vmem>>, vector<1x8x128xf32>
    %5 = vector.shape_cast %4 : vector<1x8x128xf32> to vector<8x128xf32>
    %c0_6 = arith.constant 0 : index
    %c0_7 = arith.constant 0 : index
    %6 = memref.load %arg1[%c0_6, %c0_7] : memref<3x5xf32, #tpu.memory_space<smem>>
    %7 = vector.broadcast %6 : f32 to vector<8x128xf32>
    %8 = arith.mulf %1, %7 : vector<8x128xf32>
    %c0_8 = arith.constant 0 : index
    %9 = memref.load %arg2[%c0_8] : memref<5xf32, #tpu.memory_space<smem>>
    %10 = vector.broadcast %9 : f32 to vector<8x128xf32>
    %11 = arith.addf %8, %10 : vector<8x128xf32>
    %c1_9 = arith.constant 1 : index
    %c0_10 = arith.constant 0 : index
    %12 = memref.load %arg1[%c1_9, %c0_10] : memref<3x5xf32, #tpu.memory_space<smem>>
    %13 = vector.broadcast %12 : f32 to vector<8x128xf32>
    %14 = arith.mulf %3, %13 : vector<8x128xf32>
    %15 = arith.addf %11, %14 : vector<8x128xf32>
    %c2_11 = arith.constant 2 : index
    %c0_12 = arith.constant 0 : index
    %16 = memref.load %arg1[%c2_11, %c0_12] : memref<3x5xf32, #tpu.memory_space<smem>>
    %17 = vector.broadcast %16 : f32 to vector<8x128xf32>
    %18 = arith.mulf %5, %17 : vector<8x128xf32>
    %19 = arith.addf %15, %18 : vector<8x128xf32>
    %20 = math.tanh %19 : vector<8x128xf32>
    %c0_13 = arith.constant 0 : index
    %c0_14 = arith.constant 0 : index
    %21 = memref.load %arg3[%c0_13, %c0_14] : memref<5x2xf32, #tpu.memory_space<smem>>
    %22 = vector.broadcast %21 : f32 to vector<8x128xf32>
    %23 = arith.mulf %20, %22 : vector<8x128xf32>
    %c0_15 = arith.constant 0 : index
    %24 = memref.load %arg4[%c0_15] : memref<2xf32, #tpu.memory_space<smem>>
    %25 = vector.broadcast %24 : f32 to vector<8x128xf32>
    %26 = arith.addf %23, %25 : vector<8x128xf32>
    %c0_16 = arith.constant 0 : index
    %c1_17 = arith.constant 1 : index
    %27 = memref.load %arg3[%c0_16, %c1_17] : memref<5x2xf32, #tpu.memory_space<smem>>
    %28 = vector.broadcast %27 : f32 to vector<8x128xf32>
    %29 = arith.mulf %20, %28 : vector<8x128xf32>
    %c1_18 = arith.constant 1 : index
    %30 = memref.load %arg4[%c1_18] : memref<2xf32, #tpu.memory_space<smem>>
    %31 = vector.broadcast %30 : f32 to vector<8x128xf32>
    %32 = arith.addf %29, %31 : vector<8x128xf32>
    %c0_19 = arith.constant 0 : index
    %c1_20 = arith.constant 1 : index
    %33 = memref.load %arg1[%c0_19, %c1_20] : memref<3x5xf32, #tpu.memory_space<smem>>
    %34 = vector.broadcast %33 : f32 to vector<8x128xf32>
    %35 = arith.mulf %1, %34 : vector<8x128xf32>
    %c1_21 = arith.constant 1 : index
    %36 = memref.load %arg2[%c1_21] : memref<5xf32, #tpu.memory_space<smem>>
    %37 = vector.broadcast %36 : f32 to vector<8x128xf32>
    %38 = arith.addf %35, %37 : vector<8x128xf32>
    %c1_22 = arith.constant 1 : index
    %c1_23 = arith.constant 1 : index
    %39 = memref.load %arg1[%c1_22, %c1_23] : memref<3x5xf32, #tpu.memory_space<smem>>
    %40 = vector.broadcast %39 : f32 to vector<8x128xf32>
    %41 = arith.mulf %3, %40 : vector<8x128xf32>
    %42 = arith.addf %38, %41 : vector<8x128xf32>
    %c2_24 = arith.constant 2 : index
    %c1_25 = arith.constant 1 : index
    %43 = memref.load %arg1[%c2_24, %c1_25] : memref<3x5xf32, #tpu.memory_space<smem>>
    %44 = vector.broadcast %43 : f32 to vector<8x128xf32>
    %45 = arith.mulf %5, %44 : vector<8x128xf32>
    %46 = arith.addf %42, %45 : vector<8x128xf32>
    %47 = math.tanh %46 : vector<8x128xf32>
    %c1_26 = arith.constant 1 : index
    %c0_27 = arith.constant 0 : index
    %48 = memref.load %arg3[%c1_26, %c0_27] : memref<5x2xf32, #tpu.memory_space<smem>>
    %49 = vector.broadcast %48 : f32 to vector<8x128xf32>
    %50 = arith.mulf %47, %49 : vector<8x128xf32>
    %51 = arith.addf %26, %50 : vector<8x128xf32>
    %c1_28 = arith.constant 1 : index
    %c1_29 = arith.constant 1 : index
    %52 = memref.load %arg3[%c1_28, %c1_29] : memref<5x2xf32, #tpu.memory_space<smem>>
    %53 = vector.broadcast %52 : f32 to vector<8x128xf32>
    %54 = arith.mulf %47, %53 : vector<8x128xf32>
    %55 = arith.addf %32, %54 : vector<8x128xf32>
    %c0_30 = arith.constant 0 : index
    %c2_31 = arith.constant 2 : index
    %56 = memref.load %arg1[%c0_30, %c2_31] : memref<3x5xf32, #tpu.memory_space<smem>>
    %57 = vector.broadcast %56 : f32 to vector<8x128xf32>
    %58 = arith.mulf %1, %57 : vector<8x128xf32>
    %c2_32 = arith.constant 2 : index
    %59 = memref.load %arg2[%c2_32] : memref<5xf32, #tpu.memory_space<smem>>
    %60 = vector.broadcast %59 : f32 to vector<8x128xf32>
    %61 = arith.addf %58, %60 : vector<8x128xf32>
    %c1_33 = arith.constant 1 : index
    %c2_34 = arith.constant 2 : index
    %62 = memref.load %arg1[%c1_33, %c2_34] : memref<3x5xf32, #tpu.memory_space<smem>>
    %63 = vector.broadcast %62 : f32 to vector<8x128xf32>
    %64 = arith.mulf %3, %63 : vector<8x128xf32>
    %65 = arith.addf %61, %64 : vector<8x128xf32>
    %c2_35 = arith.constant 2 : index
    %c2_36 = arith.constant 2 : index
    %66 = memref.load %arg1[%c2_35, %c2_36] : memref<3x5xf32, #tpu.memory_space<smem>>
    %67 = vector.broadcast %66 : f32 to vector<8x128xf32>
    %68 = arith.mulf %5, %67 : vector<8x128xf32>
    %69 = arith.addf %65, %68 : vector<8x128xf32>
    %70 = math.tanh %69 : vector<8x128xf32>
    %c2_37 = arith.constant 2 : index
    %c0_38 = arith.constant 0 : index
    %71 = memref.load %arg3[%c2_37, %c0_38] : memref<5x2xf32, #tpu.memory_space<smem>>
    %72 = vector.broadcast %71 : f32 to vector<8x128xf32>
    %73 = arith.mulf %70, %72 : vector<8x128xf32>
    %74 = arith.addf %51, %73 : vector<8x128xf32>
    %c2_39 = arith.constant 2 : index
    %c1_40 = arith.constant 1 : index
    %75 = memref.load %arg3[%c2_39, %c1_40] : memref<5x2xf32, #tpu.memory_space<smem>>
    %76 = vector.broadcast %75 : f32 to vector<8x128xf32>
    %77 = arith.mulf %70, %76 : vector<8x128xf32>
    %78 = arith.addf %55, %77 : vector<8x128xf32>
    %c0_41 = arith.constant 0 : index
    %c3 = arith.constant 3 : index
    %79 = memref.load %arg1[%c0_41, %c3] : memref<3x5xf32, #tpu.memory_space<smem>>
    %80 = vector.broadcast %79 : f32 to vector<8x128xf32>
    %81 = arith.mulf %1, %80 : vector<8x128xf32>
    %c3_42 = arith.constant 3 : index
    %82 = memref.load %arg2[%c3_42] : memref<5xf32, #tpu.memory_space<smem>>
    %83 = vector.broadcast %82 : f32 to vector<8x128xf32>
    %84 = arith.addf %81, %83 : vector<8x128xf32>
    %c1_43 = arith.constant 1 : index
    %c3_44 = arith.constant 3 : index
    %85 = memref.load %arg1[%c1_43, %c3_44] : memref<3x5xf32, #tpu.memory_space<smem>>
    %86 = vector.broadcast %85 : f32 to vector<8x128xf32>
    %87 = arith.mulf %3, %86 : vector<8x128xf32>
    %88 = arith.addf %84, %87 : vector<8x128xf32>
    %c2_45 = arith.constant 2 : index
    %c3_46 = arith.constant 3 : index
    %89 = memref.load %arg1[%c2_45, %c3_46] : memref<3x5xf32, #tpu.memory_space<smem>>
    %90 = vector.broadcast %89 : f32 to vector<8x128xf32>
    %91 = arith.mulf %5, %90 : vector<8x128xf32>
    %92 = arith.addf %88, %91 : vector<8x128xf32>
    %93 = math.tanh %92 : vector<8x128xf32>
    %c3_47 = arith.constant 3 : index
    %c0_48 = arith.constant 0 : index
    %94 = memref.load %arg3[%c3_47, %c0_48] : memref<5x2xf32, #tpu.memory_space<smem>>
    %95 = vector.broadcast %94 : f32 to vector<8x128xf32>
    %96 = arith.mulf %93, %95 : vector<8x128xf32>
    %97 = arith.addf %74, %96 : vector<8x128xf32>
    %c3_49 = arith.constant 3 : index
    %c1_50 = arith.constant 1 : index
    %98 = memref.load %arg3[%c3_49, %c1_50] : memref<5x2xf32, #tpu.memory_space<smem>>
    %99 = vector.broadcast %98 : f32 to vector<8x128xf32>
    %100 = arith.mulf %93, %99 : vector<8x128xf32>
    %101 = arith.addf %78, %100 : vector<8x128xf32>
    %c0_51 = arith.constant 0 : index
    %c4 = arith.constant 4 : index
    %102 = memref.load %arg1[%c0_51, %c4] : memref<3x5xf32, #tpu.memory_space<smem>>
    %103 = vector.broadcast %102 : f32 to vector<8x128xf32>
    %104 = arith.mulf %1, %103 : vector<8x128xf32>
    %c4_52 = arith.constant 4 : index
    %105 = memref.load %arg2[%c4_52] : memref<5xf32, #tpu.memory_space<smem>>
    %106 = vector.broadcast %105 : f32 to vector<8x128xf32>
    %107 = arith.addf %104, %106 : vector<8x128xf32>
    %c1_53 = arith.constant 1 : index
    %c4_54 = arith.constant 4 : index
    %108 = memref.load %arg1[%c1_53, %c4_54] : memref<3x5xf32, #tpu.memory_space<smem>>
    %109 = vector.broadcast %108 : f32 to vector<8x128xf32>
    %110 = arith.mulf %3, %109 : vector<8x128xf32>
    %111 = arith.addf %107, %110 : vector<8x128xf32>
    %c2_55 = arith.constant 2 : index
    %c4_56 = arith.constant 4 : index
    %112 = memref.load %arg1[%c2_55, %c4_56] : memref<3x5xf32, #tpu.memory_space<smem>>
    %113 = vector.broadcast %112 : f32 to vector<8x128xf32>
    %114 = arith.mulf %5, %113 : vector<8x128xf32>
    %115 = arith.addf %111, %114 : vector<8x128xf32>
    %116 = math.tanh %115 : vector<8x128xf32>
    %c4_57 = arith.constant 4 : index
    %c0_58 = arith.constant 0 : index
    %117 = memref.load %arg3[%c4_57, %c0_58] : memref<5x2xf32, #tpu.memory_space<smem>>
    %118 = vector.broadcast %117 : f32 to vector<8x128xf32>
    %119 = arith.mulf %116, %118 : vector<8x128xf32>
    %120 = arith.addf %97, %119 : vector<8x128xf32>
    %c4_59 = arith.constant 4 : index
    %c1_60 = arith.constant 1 : index
    %121 = memref.load %arg3[%c4_59, %c1_60] : memref<5x2xf32, #tpu.memory_space<smem>>
    %122 = vector.broadcast %121 : f32 to vector<8x128xf32>
    %123 = arith.mulf %116, %122 : vector<8x128xf32>
    %124 = arith.addf %101, %123 : vector<8x128xf32>
    %c0_61 = arith.constant 0 : index
    %c0_62 = arith.constant 0 : index
    %c0_63 = arith.constant 0 : index
    %125 = vector.load %arg6[%c0_61, %c0_62, %c0_63] : memref<2x8x128xf32, #tpu.memory_space<vmem>>, vector<1x8x128xf32>
    %126 = vector.shape_cast %125 : vector<1x8x128xf32> to vector<8x128xf32>
    %127 = vector.shape_cast %120 : vector<8x128xf32> to vector<1x8x128xf32>
    tpu.vector_store %arg6[%c0_61, %c0_62, %c0_63], %127 {strides = array<i32>} : memref<2x8x128xf32, #tpu.memory_space<vmem>>, vector<1x8x128xf32>,
    %c1_64 = arith.constant 1 : index
    %c0_65 = arith.constant 0 : index
    %c0_66 = arith.constant 0 : index
    %128 = vector.load %arg6[%c1_64, %c0_65, %c0_66] : memref<2x8x128xf32, #tpu.memory_space<vmem>>, vector<1x8x128xf32>
    %129 = vector.shape_cast %128 : vector<1x8x128xf32> to vector<8x128xf32>
    %130 = vector.shape_cast %124 : vector<8x128xf32> to vector<1x8x128xf32>
    tpu.vector_store %arg6[%c1_64, %c0_65, %c0_66], %130 {strides = array<i32>} : memref<2x8x128xf32, #tpu.memory_space<vmem>>, vector<1x8x128xf32>,
    return
  }
  func.func @transform_0(%arg0: i32) -> (i32, i32) {
    %c0_i32 = arith.constant 0 : i32
    %c0_i32_0 = arith.constant 0 : i32
    %c0_i32_1 = arith.constant 0 : i32
    return %c0_i32, %c0_i32_0 : i32, i32
  }
  func.func @transform_1(%arg0: i32) -> i32 {
    %c0_i32 = arith.constant 0 : i32
    %c0_i32_0 = arith.constant 0 : i32
    return %c0_i32 : i32
  }
  func.func @transform_2(%arg0: i32) -> (i32, i32) {
    %c0_i32 = arith.constant 0 : i32
    %c0_i32_0 = arith.constant 0 : i32
    %c0_i32_1 = arith.constant 0 : i32
    return %c0_i32, %c0_i32_0 : i32, i32
  }
  func.func @transform_3(%arg0: i32) -> i32 {
    %c0_i32 = arith.constant 0 : i32
    %c0_i32_0 = arith.constant 0 : i32
    return %c0_i32 : i32
  }
  func.func @transform_4(%arg0: i32) -> (i32, i32, i32) {
    %c0_i32 = arith.constant 0 : i32
    %c0_i32_0 = arith.constant 0 : i32
    %c0_i32_1 = arith.constant 0 : i32
    return %c0_i32, %arg0, %c0_i32_0 : i32, i32, i32
  }
  func.func @transform_5(%arg0: i32) -> (i32, i32, i32) {
    %c0_i32 = arith.constant 0 : i32
    %c0_i32_0 = arith.constant 0 : i32
    %c0_i32_1 = arith.constant 0 : i32
    return %c0_i32, %arg0, %c0_i32_0 : i32, i32, i32
  }
}

</mosaic_0001>

<llo_original>
// kernel: pinn_forward_fm.1
$region0: #{pinn_forward_fm.1}
  #allocation0 [shape = 'u32[]', space=smem, size = 0x4, offset = 0x4, fixed_abs, tag = 'smem constant byte address 0x4 - core index']
  #allocation1 [shape = 'u32[72,128]{1,0:T(1,128)}', space=vmem, size = 0x9000, scoped, tag = 'internal scratch']
  %s0 = inlined_call_operand.vmem [shape: f32[3,5], index: 0, kind: input, shape index: {}]
  %s1 = inlined_call_operand.vmem [shape: f32[5], index: 1, kind: input, shape index: {}]
  %s2 = inlined_call_operand.vmem [shape: f32[5,2], index: 2, kind: input, shape index: {}]
  %s3 = inlined_call_operand.vmem [shape: f32[2], index: 3, kind: input, shape index: {}]
  %s4 = inlined_call_operand.vmem [shape: f32[3,16,128], index: 4, kind: input, shape index: {}]
  %s5 = inlined_call_operand.vmem [shape: f32[2,16,128], index: 5, kind: output, shape index: {}]
  %s6 = sld [smem:[#allocation0]]
  $region141: #{pinn_forward_fm.1} parent=0
    _
  %s8 = ssub.s32 1, %s6
  %s9 = scalar_select 0, %s8, %s6
  $region1: #{pinn_forward_fm.1} parent=0
    #allocation2 [shape = 'u8[2048]{0}', space=smem, size = 0x800, scoped, tag = 'input window, operand 0, single buffered']
    #allocation3 [shape = 's32[2]{0}', space=sflag, size = 0x8, scoped, tag = 'scoped memory for pinn_forward_fm.1']
    #allocation4 [shape = 'u8[512]{0}', space=smem, size = 0x200, scoped, tag = 'input window, operand 1, single buffered']
    #allocation5 [shape = 's32[1]{0}', space=sflag, size = 0x4, scoped, tag = 'scoped memory for pinn_forward_fm.1']
    #allocation6 [shape = 'u8[4096]{0}', space=smem, size = 0x1000, scoped, tag = 'input window, operand 2, single buffered']
    #allocation7 [shape = 'u8[512]{0}', space=smem, size = 0x200, scoped, tag = 'input window, operand 3, single buffered']
    #allocation8 [shape = 's32[1]{0}', space=sflag, size = 0x4, scoped, tag = 'scoped memory for pinn_forward_fm.1']
    #allocation9 [shape = 'u8[24576]{0}', space=vmem, size = 0x6000, scoped, tag = 'input window, operand 4']
    #allocation10 [shape = 'u8[16384]{0}', space=vmem, size = 0x4000, scoped, tag = 'output window, operand 0']
    %10 = vsyncpa [#allocation3], 0
    %11 = vsyncpa [#allocation5], 0
    %12 = vsyncpa [#allocation8], 0
    loop: start=0, step=1, limit=4
    $region2: #{pinn_forward_fm.1} parent=1 // loop_pre_header
      _
    $region3: #{pinn_forward_fm.1} parent=1 // loop_header
      %s14 = sphi 0, %s18
      %p15 = scmp.ge.s32.totalorder %s14, 4
      %s22 = sphi 0, %s22
      %s24 = sphi 0, %s22
      %s25 = sphi 0, %s24
      %s39 = sphi 0, %s25
      %s43 = sphi 0, %s43
      %s45 = sphi 0, %s43
      %s46 = sphi 0, %s45
      %s60 = sphi 0, %s46
      %s64 = sphi 0, %s64
      %s66 = sphi 0, %s64
      %s67 = sphi 0, %s66
      %s81 = sphi 0, %s67
      %s85 = sphi 0, %s85
      %s87 = sphi 0, %s85
      %s88 = sphi 0, %s87
      %s102 = sphi 0, %s88
      %s108 = sphi 0, %s110
      %s111 = sphi 0, %s108
      %s112 = sphi 0, %s111
      %s128 = sphi 0, %s112
      %s134 = sphi 0, %s136
      %s137 = sphi 0, %s134
      %s138 = sphi 0, %s137
      %s154 = sphi 0, %s138
    $region4: #{pinn_forward_fm.1} parent=1 // loop_header_branch
      %17 = sbr.rel (%p15) target = $region8
    $region5: #{pinn_forward_fm.1} parent=1 // loop_body
      %s19 = ssub.s32 %s14, 1
      %s20 = ssub.s32 %s14, 2
      %s21 = sadd.s32 %s14, 1
      %s23 = sadd.s32 %s22, 1
      %p26 = scmp.eq.s32.totalorder %s14, 1
      %p27 = scmp.ne.s32.totalorder %s22, %s24
      %p28 = scmp.eq.s32.totalorder %s14, 0
      %p29 = por %p27, %p28
      %p30 = scmp.ne.s32.totalorder %s22, %s24
      %p31 = scmp.eq.s32.totalorder %s19, 1
      %p32 = por %p30, %p31
      %p33 = scmp.ne.s32.totalorder %s24, %s25
      %p34 = scmp.eq.s32.totalorder %s19, 0
      %p35 = por %p33, %p34
      %p36 = scmp.ne.s32.totalorder %s24, %s25
      %p37 = scmp.eq.s32.totalorder %s20, 1
      %p38 = por %p36, %p37
      %p40 = scmp.ne.s32.totalorder %s25, %s39
      %p41 = scmp.eq.s32.totalorder %s20, 0
      %p42 = por %p40, %p41
      %s44 = sadd.s32 %s43, 1
      %p47 = scmp.eq.s32.totalorder %s14, 1
      %p48 = scmp.ne.s32.totalorder %s43, %s45
      %p49 = scmp.eq.s32.totalorder %s14, 0
      %p50 = por %p48, %p49
      %p51 = scmp.ne.s32.totalorder %s43, %s45
      %p52 = scmp.eq.s32.totalorder %s19, 1
      %p53 = por %p51, %p52
      %p54 = scmp.ne.s32.totalorder %s45, %s46
      %p55 = scmp.eq.s32.totalorder %s19, 0
      %p56 = por %p54, %p55
      %p57 = scmp.ne.s32.totalorder %s45, %s46
      %p58 = scmp.eq.s32.totalorder %s20, 1
      %p59 = por %p57, %p58
      %p61 = scmp.ne.s32.totalorder %s46, %s60
      %p62 = scmp.eq.s32.totalorder %s20, 0
      %p63 = por %p61, %p62
      %s65 = sadd.s32 %s64, 1
      %p68 = scmp.eq.s32.totalorder %s14, 1
      %p69 = scmp.ne.s32.totalorder %s64, %s66
      %p70 = scmp.eq.s32.totalorder %s14, 0
      %p71 = por %p69, %p70
      %p72 = scmp.ne.s32.totalorder %s64, %s66
      %p73 = scmp.eq.s32.totalorder %s19, 1
      %p74 = por %p72, %p73
      %p75 = scmp.ne.s32.totalorder %s66, %s67
      %p76 = scmp.eq.s32.totalorder %s19, 0
      %p77 = por %p75, %p76
      %p78 = scmp.ne.s32.totalorder %s66, %s67
      %p79 = scmp.eq.s32.totalorder %s20, 1
      %p80 = por %p78, %p79
      %p82 = scmp.ne.s32.totalorder %s67, %s81
      %p83 = scmp.eq.s32.totalorder %s20, 0
      %p84 = por %p82, %p83
      %s86 = sadd.s32 %s85, 1
      %p89 = scmp.eq.s32.totalorder %s14, 1
      %p90 = scmp.ne.s32.totalorder %s85, %s87
      %p91 = scmp.eq.s32.totalorder %s14, 0
      %p92 = por %p90, %p91
      %p93 = scmp.ne.s32.totalorder %s85, %s87
      %p94 = scmp.eq.s32.totalorder %s19, 1
      %p95 = por %p93, %p94
      %p96 = scmp.ne.s32.totalorder %s87, %s88
      %p97 = scmp.eq.s32.totalorder %s19, 0
      %p98 = por %p96, %p97
      %p99 = scmp.ne.s32.totalorder %s87, %s88
      %p100 = scmp.eq.s32.totalorder %s20, 1
      %p101 = por %p99, %p100
      %p103 = scmp.ne.s32.totalorder %s88, %s102
      %p104 = scmp.eq.s32.totalorder %s20, 0
      %p105 = por %p103, %p104
      %s106 = ssub.s32 %s14, %s21
      %p107 = scmp.eq.s32.totalorder %s106, 0
      %s109 = sadd.s32 %s108, 1
      %s110 = scalar_select %p107, %s108, %s109
      %p113 = pneg %p107
      %p114 = scmp.eq.s32.totalorder %s14, 1
      %p115 = por %p113, %p114
      %p116 = scmp.ne.s32.totalorder %s108, %s111
      %p117 = scmp.eq.s32.totalorder %s14, 0
      %p118 = por %p116, %p117
      %p119 = scmp.ne.s32.totalorder %s108, %s111
      %p120 = scmp.eq.s32.totalorder %s19, 1
      %p121 = por %p119, %p120
      %p122 = scmp.ne.s32.totalorder %s111, %s112
      %p123 = scmp.eq.s32.totalorder %s19, 0
      %p124 = por %p122, %p123
      %p125 = scmp.ne.s32.totalorder %s111, %s112
      %p126 = scmp.eq.s32.totalorder %s20, 1
      %p127 = por %p125, %p126
      %p129 = scmp.ne.s32.totalorder %s112, %s128
      %p130 = scmp.eq.s32.totalorder %s20, 0
      %p131 = por %p129, %p130
      %s132 = ssub.s32 %s14, %s21
      %p133 = scmp.eq.s32.totalorder %s132, 0
      %s135 = sadd.s32 %s134, 1
      %s136 = scalar_select %p133, %s134, %s135
      %p139 = pneg %p133
      %p140 = scmp.eq.s32.totalorder %s14, 1
      %p141 = por %p139, %p140
      %p142 = scmp.ne.s32.totalorder %s134, %s137
      %p143 = scmp.eq.s32.totalorder %s14, 0
      %p144 = por %p142, %p143
      %p145 = scmp.ne.s32.totalorder %s134, %s137
      %p146 = scmp.eq.s32.totalorder %s19, 1
      %p147 = por %p145, %p146
      %p148 = scmp.ne.s32.totalorder %s137, %s138
      %p149 = scmp.eq.s32.totalorder %s19, 0
      %p150 = por %p148, %p149
      %p151 = scmp.ne.s32.totalorder %s137, %s138
      %p152 = scmp.eq.s32.totalorder %s20, 1
      %p153 = por %p151, %p152
      %p155 = scmp.ne.s32.totalorder %s138, %s154
      %p156 = scmp.eq.s32.totalorder %s20, 0
      %p157 = por %p155, %p156
      %p158 = scmp.le.s32.totalorder 1, %s14
      %p159 = scmp.lt.s32.totalorder %s14, 3
      %p160 = pnand %p158, %p159
      %p161 = pneg %p160
      // Predicated region
      $region9: #{pinn_forward_fm.1} parent=5 // pred_check
        _
      $region10: #{pinn_forward_fm.1} parent=5 // pred_check_branch
        %163 = sbr.rel (%p160) target = $region12
      $region11: #{pinn_forward_fm.1} parent=5 // pred_region
        %s164 = ssub.s32 %s14, 1
        // Predicated region
        $region13: #{pinn_forward_fm.1} parent=11 // pred_check
          %p165 = pneg %p35
        $region14: #{pinn_forward_fm.1} parent=11 // pred_check_branch
          %167 = sbr.rel (%p165) target = $region16
        $region15: #{pinn_forward_fm.1} parent=11 // pred_region
          %169 = vsyncadd [#allocation3], 0
          %s171 = sshll.u32 %s0, 4
          %s172 = int_to_ptr.vmem [resolvable:$true] %s171
          %174 = dma.vmem_to_smem %s172, 64, [#allocation2], [#allocation3]
        $region16: #{pinn_forward_fm.1} parent=11 // pred_fallthru
          _
        // Predicated region
        $region17: #{pinn_forward_fm.1} parent=11 // pred_check
          %p175 = pneg %p56
        $region18: #{pinn_forward_fm.1} parent=11 // pred_check_branch
          %177 = sbr.rel (%p175) target = $region20
        $region19: #{pinn_forward_fm.1} parent=11 // pred_region
          %179 = vsyncadd [#allocation5], 0
          %s181 = sshll.u32 %s1, 4
          %s182 = int_to_ptr.vmem [resolvable:$true] %s181
          %184 = dma.vmem_to_smem %s182, 16, [#allocation4], [#allocation5]
        $region20: #{pinn_forward_fm.1} parent=11 // pred_fallthru
          _
        // Predicated region
        $region21: #{pinn_forward_fm.1} parent=11 // pred_check
          %p185 = pneg %p77
        $region22: #{pinn_forward_fm.1} parent=11 // pred_check_branch
          %187 = sbr.rel (%p185) target = $region24
        $region23: #{pinn_forward_fm.1} parent=11 // pred_region
          %189 = vsyncadd [#allocation5], 0
          %s191 = sshll.u32 %s2, 4
          %s192 = int_to_ptr.vmem [resolvable:$true] %s191
          %194 = dma.vmem_to_smem %s192, 128, [#allocation6], [#allocation5]
        $region24: #{pinn_forward_fm.1} parent=11 // pred_fallthru
          _
        // Predicated region
        $region25: #{pinn_forward_fm.1} parent=11 // pred_check
          %p195 = pneg %p98
        $region26: #{pinn_forward_fm.1} parent=11 // pred_check_branch
          %197 = sbr.rel (%p195) target = $region28
        $region27: #{pinn_forward_fm.1} parent=11 // pred_region
          %199 = vsyncadd [#allocation8], 0
          %s201 = sshll.u32 %s3, 4
          %s202 = int_to_ptr.vmem [resolvable:$true] %s201
          %204 = dma.vmem_to_smem %s202, 16, [#allocation7], [#allocation8]
        $region28: #{pinn_forward_fm.1} parent=11 // pred_fallthru
          _
      $region12: #{pinn_forward_fm.1} parent=5 // pred_fallthru
        _
      %p205 = scmp.lt.s32.totalorder %s14, 2
      // Predicated region
      $region29: #{pinn_forward_fm.1} parent=5 // pred_check
        %p206 = pneg %p205
      $region30: #{pinn_forward_fm.1} parent=5 // pred_check_branch
        %208 = sbr.rel (%p206) target = $region32
      $region31: #{pinn_forward_fm.1} parent=5 // pred_region
        // Predicated region
        $region33: #{pinn_forward_fm.1} parent=31 // pred_check
          %p209 = pneg %p118
        $region34: #{pinn_forward_fm.1} parent=31 // pred_check_branch
          %211 = sbr.rel (%p209) target = $region36
        $region35: #{pinn_forward_fm.1} parent=31 // pred_region
          %s212 = sand.u32 %s108, 1
          %s213 = sand.u32 %s108, 1
          %s214 = smul.addr %s213, 24
          %s215 = scalar_lea.vmem [#allocation9], %s214
          %s216 = smul.addr %s14, 8
          %s217 = scalar_lea.vmem %s4, %s216
          // Predicated region
          $region37: #{pinn_forward_fm.1} parent=35 // pred_check
            _
          $region38: #{pinn_forward_fm.1} parent=35 // pred_check_branch
            %219 = sbr.rel (0) target = $region40
          $region39: #{pinn_forward_fm.1} parent=35 // pred_region
            // Predicated region
            $region41: #{pinn_forward_fm.1} parent=39 // pred_check
              _
            $region42: #{pinn_forward_fm.1} parent=39 // pred_check_branch
              %221 = sbr.rel (0) target = $region44
            $region43: #{pinn_forward_fm.1} parent=39 // pred_region
              // Predicated region
              $region56: #{pinn_forward_fm.1} parent=43 // pred_check
                _
              $region57: #{pinn_forward_fm.1} parent=43 // pred_check_branch
                %241 = sbr.rel (0) target = $region59
              $region58: #{pinn_forward_fm.1} parent=43 // pred_region
                loop: start=0, step=1, limit=1
                $region60: #{pinn_forward_fm.1} parent=58 // loop_pre_header
                  _
                $region61: #{pinn_forward_fm.1} parent=58 // loop_header
                  %s243 = sphi 0, %s247
                  %p244 = scmp.ge.s32.totalorder %s243, 1
                  %s248 = sphi %s217, %s217
                  %s249 = sphi %s215, %s215
                $region62: #{pinn_forward_fm.1} parent=58 // loop_header_branch
                  %246 = sbr.rel (%p244) target = $region66
                $region63: #{pinn_forward_fm.1} parent=58 // loop_body
                  %v250 = vld [vmem:[%s248] sm:$0xff]
                  %251 = vst [vmem:[%s249] sm:$0xff] %v250
                  %v252 = vld [vmem:[%s248 + $0x10] sm:$0xff]
                  %253 = vst [vmem:[%s249 + $0x8] sm:$0xff] %v252
                  %v254 = vld [vmem:[%s248 + $0x20] sm:$0xff]
                  %255 = vst [vmem:[%s249 + $0x10] sm:$0xff] %v254
                $region64: #{pinn_forward_fm.1} parent=58 // loop_footer
                  %s247 = sadd.s32 1, %s243
                $region65: #{pinn_forward_fm.1} parent=58 // loop_footer_branch
                  %242 = sbr.rel target = $region61
                $region66: #{pinn_forward_fm.1} parent=58 // loop_exit
                  _
              $region59: #{pinn_forward_fm.1} parent=43 // pred_fallthru
                _
              // Predicated region
              $region67: #{pinn_forward_fm.1} parent=43 // pred_check
                _
              $region68: #{pinn_forward_fm.1} parent=43 // pred_check_branch
                %257 = sbr.rel target = $region70
              $region69: #{pinn_forward_fm.1} parent=43 // pred_region
                _
              $region70: #{pinn_forward_fm.1} parent=43 // pred_fallthru
                _
            $region44: #{pinn_forward_fm.1} parent=39 // pred_fallthru
              _
            // Predicated region
            $region45: #{pinn_forward_fm.1} parent=39 // pred_check
              _
            $region46: #{pinn_forward_fm.1} parent=39 // pred_check_branch
              %223 = sbr.rel target = $region48
            $region47: #{pinn_forward_fm.1} parent=39 // pred_region
              %s225 = ssub.s32 256, 1
              loop: start=0, step=1, limit=1
              $region49: #{pinn_forward_fm.1} parent=47 // loop_pre_header
                _
              $region50: #{pinn_forward_fm.1} parent=47 // loop_header
                %s227 = sphi 0, %s231
                %p228 = scmp.ge.s32.totalorder %s227, 1
                %s232 = sphi %s217, %s217
                %s233 = sphi %s215, %s215
              $region51: #{pinn_forward_fm.1} parent=47 // loop_header_branch
                %230 = sbr.rel (%p228) target = $region55
              $region52: #{pinn_forward_fm.1} parent=47 // loop_body
                %v234 = vld [vmem:[%s232] sm:%s225]
                %235 = vst [vmem:[%s233] sm:%s225] %v234
                %v236 = vld [vmem:[%s232 + $0x10] sm:%s225]
                %237 = vst [vmem:[%s233 + $0x8] sm:%s225] %v236
                %v238 = vld [vmem:[%s232 + $0x20] sm:%s225]
                %239 = vst [vmem:[%s233 + $0x10] sm:%s225] %v238
              $region53: #{pinn_forward_fm.1} parent=47 // loop_footer
                %s231 = sadd.s32 1, %s227
              $region54: #{pinn_forward_fm.1} parent=47 // loop_footer_branch
                %226 = sbr.rel target = $region50
              $region55: #{pinn_forward_fm.1} parent=47 // loop_exit
                _
            $region48: #{pinn_forward_fm.1} parent=39 // pred_fallthru
              _
          $region40: #{pinn_forward_fm.1} parent=35 // pred_fallthru
            _
          %258 = vnop
        $region36: #{pinn_forward_fm.1} parent=31 // pred_fallthru
          _
      $region32: #{pinn_forward_fm.1} parent=5 // pred_fallthru
        _
      %p259 = scmp.le.s32.totalorder 1, %s14
      %p260 = scmp.lt.s32.totalorder %s14, 3
      %p261 = pnand %p259, %p260
      %p262 = pneg %p261
      // Predicated region
      $region71: #{pinn_forward_fm.1} parent=5 // pred_check
        _
      $region72: #{pinn_forward_fm.1} parent=5 // pred_check_branch
        %264 = sbr.rel (%p261) target = $region74
      $region73: #{pinn_forward_fm.1} parent=5 // pred_region
        %s265 = ssub.s32 %s14, 1
        // Predicated region
        $region75: #{pinn_forward_fm.1} parent=73 // pred_check
          %p266 = pneg %p35
        $region76: #{pinn_forward_fm.1} parent=73 // pred_check_branch
          %268 = sbr.rel (%p266) target = $region78
        $region77: #{pinn_forward_fm.1} parent=73 // pred_region
          %270 = dma.done [#allocation3], 64
        $region78: #{pinn_forward_fm.1} parent=73 // pred_fallthru
          _
        // Predicated region
        $region79: #{pinn_forward_fm.1} parent=73 // pred_check
          %p271 = pneg %p56
        $region80: #{pinn_forward_fm.1} parent=73 // pred_check_branch
          %273 = sbr.rel (%p271) target = $region82
        $region81: #{pinn_forward_fm.1} parent=73 // pred_region
          %275 = dma.done [#allocation5], 16
        $region82: #{pinn_forward_fm.1} parent=73 // pred_fallthru
          _
        // Predicated region
        $region83: #{pinn_forward_fm.1} parent=73 // pred_check
          %p276 = pneg %p77
        $region84: #{pinn_forward_fm.1} parent=73 // pred_check_branch
          %278 = sbr.rel (%p276) target = $region86
        $region85: #{pinn_forward_fm.1} parent=73 // pred_region
          %280 = dma.done [#allocation5], 128
        $region86: #{pinn_forward_fm.1} parent=73 // pred_fallthru
          _
        // Predicated region
        $region87: #{pinn_forward_fm.1} parent=73 // pred_check
          %p281 = pneg %p98
        $region88: #{pinn_forward_fm.1} parent=73 // pred_check_branch
          %283 = sbr.rel (%p281) target = $region90
        $region89: #{pinn_forward_fm.1} parent=73 // pred_region
          %285 = dma.done [#allocation8], 16
        $region90: #{pinn_forward_fm.1} parent=73 // pred_fallthru
          _
        %s286 = sand.u32 %s111, 1
        %s287 = sand.u32 %s111, 1
        %s288 = smul.addr %s287, 24
        %s289 = scalar_lea.vmem [#allocation9], %s288
        // Predicated region
        $region91: #{pinn_forward_fm.1} parent=73 // pred_check
          %p290 = pneg %p124
        $region92: #{pinn_forward_fm.1} parent=73 // pred_check_branch
          %292 = sbr.rel (%p290) target = $region94
        $region93: #{pinn_forward_fm.1} parent=73 // pred_region
          _
        $region94: #{pinn_forward_fm.1} parent=73 // pred_fallthru
          _
        %293 = sfence
        %p294 = pneg %p35
        %p295 = pneg %p32
        %p296 = pneg %p56
        %p297 = pneg %p53
        %p298 = pneg %p77
        %p299 = pneg %p74
        %p300 = pneg %p98
        %p301 = pneg %p95
        %s302 = sand.u32 %s111, 1
        %s303 = sand.u32 %s111, 1
        %s304 = smul.addr %s303, 24
        %s305 = scalar_lea.vmem [#allocation9], %s304
        %p306 = pneg %p124
        %p307 = pneg %p121
        %p308 = pneg %p150
        %p309 = pneg %p147
        %s310 = sand.u32 %s137, 1
        %s311 = sand.u32 %s137, 1
        %s312 = smul.addr %s311, 16
        %s313 = scalar_lea.vmem [#allocation10], %s312
        %v314 = vld [vmem:[%s289] sm:$0xff]
        %s315 = scalar_lea.vmem %s289, 8 [#allocation9]
        %v316 = vld [vmem:[%s315] sm:$0xff]
        %s317 = scalar_lea.vmem %s289, 16 [#allocation9]
        %v318 = vld [vmem:[%s317] sm:$0xff]
        %s319 = sld [smem:[#allocation2]]
        %v320 = vstv %s319
        %v321 = vmul.f32 %v314, %v320
        %s322 = sld [smem:[#allocation4]]
        %v323 = vstv %s322
        %v324 = vadd.f32 %v321, %v323
        %s325 = sld [smem:[#allocation2 + $0x80]]
        %v326 = vstv %s325
        %v327 = vmul.f32 %v316, %v326
        %v328 = vadd.f32 %v324, %v327
        %s329 = sld [smem:[#allocation2 + $0x100]]
        %v330 = vstv %s329
        %v331 = vmul.f32 %v318, %v330
        %v332 = vadd.f32 %v328, %v331
        %v333 = vtanh.pop %v332
        %s334 = sld [smem:[#allocation6]]
        %v335 = vstv %s334
        %v336 = vmul.f32 %v333, %v335
        %s337 = sld [smem:[#allocation7]]
        %v338 = vstv %s337
        %v339 = vadd.f32 %v336, %v338
        %s340 = sld [smem:[#allocation6 + $0x1]]
        %v341 = vstv %s340
        %v342 = vmul.f32 %v333, %v341
        %s343 = sld [smem:[#allocation7 + $0x1]]
        %v344 = vstv %s343
        %v345 = vadd.f32 %v342, %v344
        %s346 = sld [smem:[#allocation2 + $0x1]]
        %v347 = vstv %s346
        %v348 = vmul.f32 %v314, %v347
        %s349 = sld [smem:[#allocation4 + $0x1]]
        %v350 = vstv %s349
        %v351 = vadd.f32 %v348, %v350
        %s352 = sld [smem:[#allocation2 + $0x81]]
        %v353 = vstv %s352
        %v354 = vmul.f32 %v316, %v353
        %v355 = vadd.f32 %v351, %v354
        %s356 = sld [smem:[#allocation2 + $0x101]]
        %v357 = vstv %s356
        %v358 = vmul.f32 %v318, %v357
        %v359 = vadd.f32 %v355, %v358
        %v360 = vtanh.pop %v359
        %s361 = sld [smem:[#allocation6 + $0x80]]
        %v362 = vstv %s361
        %v363 = vmul.f32 %v360, %v362
        %v364 = vadd.f32 %v339, %v363
        %s365 = sld [smem:[#allocation6 + $0x81]]
        %v366 = vstv %s365
        %v367 = vmul.f32 %v360, %v366
        %v368 = vadd.f32 %v345, %v367
        %s369 = sld [smem:[#allocation2 + $0x2]]
        %v370 = vstv %s369
        %v371 = vmul.f32 %v314, %v370
        %s372 = sld [smem:[#allocation4 + $0x2]]
        %v373 = vstv %s372
        %v374 = vadd.f32 %v371, %v373
        %s375 = sld [smem:[#allocation2 + $0x82]]
        %v376 = vstv %s375
        %v377 = vmul.f32 %v316, %v376
        %v378 = vadd.f32 %v374, %v377
        %s379 = sld [smem:[#allocation2 + $0x102]]
        %v380 = vstv %s379
        %v381 = vmul.f32 %v318, %v380
        %v382 = vadd.f32 %v378, %v381
        %v383 = vtanh.pop %v382
        %s384 = sld [smem:[#allocation6 + $0x100]]
        %v385 = vstv %s384
        %v386 = vmul.f32 %v383, %v385
        %v387 = vadd.f32 %v364, %v386
        %s388 = sld [smem:[#allocation6 + $0x101]]
        %v389 = vstv %s388
        %v390 = vmul.f32 %v383, %v389
        %v391 = vadd.f32 %v368, %v390
        %s392 = sld [smem:[#allocation2 + $0x3]]
        %v393 = vstv %s392
        %v394 = vmul.f32 %v314, %v393
        %s395 = sld [smem:[#allocation4 + $0x3]]
        %v396 = vstv %s395
        %v397 = vadd.f32 %v394, %v396
        %s398 = sld [smem:[#allocation2 + $0x83]]
        %v399 = vstv %s398
        %v400 = vmul.f32 %v316, %v399
        %v401 = vadd.f32 %v397, %v400
        %s402 = sld [smem:[#allocation2 + $0x103]]
        %v403 = vstv %s402
        %v404 = vmul.f32 %v318, %v403
        %v405 = vadd.f32 %v401, %v404
        %v406 = vtanh.pop %v405
        %s407 = sld [smem:[#allocation6 + $0x180]]
        %v408 = vstv %s407
        %v409 = vmul.f32 %v406, %v408
        %v410 = vadd.f32 %v387, %v409
        %s411 = sld [smem:[#allocation6 + $0x181]]
        %v412 = vstv %s411
        %v413 = vmul.f32 %v406, %v412
        %v414 = vadd.f32 %v391, %v413
        %s415 = sld [smem:[#allocation2 + $0x4]]
        %v416 = vstv %s415
        %v417 = vmul.f32 %v314, %v416
        %s418 = sld [smem:[#allocation4 + $0x4]]
        %v419 = vstv %s418
        %v420 = vadd.f32 %v417, %v419
        %s421 = sld [smem:[#allocation2 + $0x84]]
        %v422 = vstv %s421
        %v423 = vmul.f32 %v316, %v422
        %v424 = vadd.f32 %v420, %v423
        %s425 = sld [smem:[#allocation2 + $0x104]]
        %v426 = vstv %s425
        %v427 = vmul.f32 %v318, %v426
        %v428 = vadd.f32 %v424, %v427
        %v429 = vtanh.pop %v428
        %s430 = sld [smem:[#allocation6 + $0x200]]
        %v431 = vstv %s430
        %v432 = vmul.f32 %v429, %v431
        %v433 = vadd.f32 %v410, %v432
        %s434 = sld [smem:[#allocation6 + $0x201]]
        %v435 = vstv %s434
        %v436 = vmul.f32 %v429, %v435
        %v437 = vadd.f32 %v414, %v436
        %438 = vst [vmem:[%s313] sm:$0xff] %v433
        %s439 = scalar_lea.vmem %s313, 8 [#allocation10]
        %440 = vst [vmem:[%s439] sm:$0xff] %v437
        %s441 = sand.u32 %s137, 1
        %s442 = sand.u32 %s137, 1
        %s443 = smul.addr %s442, 16
        %s444 = scalar_lea.vmem [#allocation10], %s443
        // Predicated region
        $region95: #{pinn_forward_fm.1} parent=73 // pred_check
          %p445 = pneg %p147
        $region96: #{pinn_forward_fm.1} parent=73 // pred_check_branch
          %447 = sbr.rel (%p445) target = $region98
        $region97: #{pinn_forward_fm.1} parent=73 // pred_region
          %s448 = smul.addr %s19, 8
          %s449 = scalar_lea.vmem %s5, %s448
          // Predicated region
          $region99: #{pinn_forward_fm.1} parent=97 // pred_check
            _
          $region100: #{pinn_forward_fm.1} parent=97 // pred_check_branch
            %451 = sbr.rel (0) target = $region102
          $region101: #{pinn_forward_fm.1} parent=97 // pred_region
            // Predicated region
            $region103: #{pinn_forward_fm.1} parent=101 // pred_check
              _
            $region104: #{pinn_forward_fm.1} parent=101 // pred_check_branch
              %453 = sbr.rel (0) target = $region106
            $region105: #{pinn_forward_fm.1} parent=101 // pred_region
              // Predicated region
              $region118: #{pinn_forward_fm.1} parent=105 // pred_check
                _
              $region119: #{pinn_forward_fm.1} parent=105 // pred_check_branch
                %471 = sbr.rel (0) target = $region121
              $region120: #{pinn_forward_fm.1} parent=105 // pred_region
                loop: start=0, step=1, limit=1
                $region122: #{pinn_forward_fm.1} parent=120 // loop_pre_header
                  _
                $region123: #{pinn_forward_fm.1} parent=120 // loop_header
                  %s473 = sphi 0, %s477
                  %p474 = scmp.ge.s32.totalorder %s473, 1
                  %s478 = sphi %s444, %s444
                  %s479 = sphi %s449, %s449
                $region124: #{pinn_forward_fm.1} parent=120 // loop_header_branch
                  %476 = sbr.rel (%p474) target = $region128
                $region125: #{pinn_forward_fm.1} parent=120 // loop_body
                  %v480 = vld [vmem:[%s478] sm:$0xff]
                  %481 = vst [vmem:[%s479] sm:$0xff] %v480
                  %v482 = vld [vmem:[%s478 + $0x8] sm:$0xff]
                  %483 = vst [vmem:[%s479 + $0x10] sm:$0xff] %v482
                $region126: #{pinn_forward_fm.1} parent=120 // loop_footer
                  %s477 = sadd.s32 1, %s473
                $region127: #{pinn_forward_fm.1} parent=120 // loop_footer_branch
                  %472 = sbr.rel target = $region123
                $region128: #{pinn_forward_fm.1} parent=120 // loop_exit
                  _
              $region121: #{pinn_forward_fm.1} parent=105 // pred_fallthru
                _
              // Predicated region
              $region129: #{pinn_forward_fm.1} parent=105 // pred_check
                _
              $region130: #{pinn_forward_fm.1} parent=105 // pred_check_branch
                %485 = sbr.rel target = $region132
              $region131: #{pinn_forward_fm.1} parent=105 // pred_region
                _
              $region132: #{pinn_forward_fm.1} parent=105 // pred_fallthru
                _
            $region106: #{pinn_forward_fm.1} parent=101 // pred_fallthru
              _
            // Predicated region
            $region107: #{pinn_forward_fm.1} parent=101 // pred_check
              _
            $region108: #{pinn_forward_fm.1} parent=101 // pred_check_branch
              %455 = sbr.rel target = $region110
            $region109: #{pinn_forward_fm.1} parent=101 // pred_region
              %s457 = ssub.s32 256, 1
              loop: start=0, step=1, limit=1
              $region111: #{pinn_forward_fm.1} parent=109 // loop_pre_header
                _
              $region112: #{pinn_forward_fm.1} parent=109 // loop_header
                %s459 = sphi 0, %s463
                %p460 = scmp.ge.s32.totalorder %s459, 1
                %s464 = sphi %s444, %s444
                %s465 = sphi %s449, %s449
              $region113: #{pinn_forward_fm.1} parent=109 // loop_header_branch
                %462 = sbr.rel (%p460) target = $region117
              $region114: #{pinn_forward_fm.1} parent=109 // loop_body
                %v466 = vld [vmem:[%s464] sm:%s457]
                %467 = vst [vmem:[%s465] sm:%s457] %v466
                %v468 = vld [vmem:[%s464 + $0x8] sm:%s457]
                %469 = vst [vmem:[%s465 + $0x10] sm:%s457] %v468
              $region115: #{pinn_forward_fm.1} parent=109 // loop_footer
                %s463 = sadd.s32 1, %s459
              $region116: #{pinn_forward_fm.1} parent=109 // loop_footer_branch
                %458 = sbr.rel target = $region112
              $region117: #{pinn_forward_fm.1} parent=109 // loop_exit
                _
            $region110: #{pinn_forward_fm.1} parent=101 // pred_fallthru
              _
          $region102: #{pinn_forward_fm.1} parent=97 // pred_fallthru
            _
          %486 = vnop
        $region98: #{pinn_forward_fm.1} parent=73 // pred_fallthru
          _
      $region74: #{pinn_forward_fm.1} parent=5 // pred_fallthru
        _
      %p487 = scmp.le.s32.totalorder 2, %s14
      // Predicated region
      $region133: #{pinn_forward_fm.1} parent=5 // pred_check
        %p488 = pneg %p487
      $region134: #{pinn_forward_fm.1} parent=5 // pred_check_branch
        %490 = sbr.rel (%p488) target = $region136
      $region135: #{pinn_forward_fm.1} parent=5 // pred_region
        %s491 = ssub.s32 %s14, 2
        // Predicated region
        $region137: #{pinn_forward_fm.1} parent=135 // pred_check
          %p492 = pneg %p153
        $region138: #{pinn_forward_fm.1} parent=135 // pred_check_branch
          %494 = sbr.rel (%p492) target = $region140
        $region139: #{pinn_forward_fm.1} parent=135 // pred_region
          %s495 = sand.u32 %s138, 1
          %s496 = sand.u32 %s138, 1
          %s497 = smul.addr %s496, 16
          %s498 = scalar_lea.vmem [#allocation10], %s497
        $region140: #{pinn_forward_fm.1} parent=135 // pred_fallthru
          _
      $region136: #{pinn_forward_fm.1} parent=5 // pred_fallthru
        _
    $region6: #{pinn_forward_fm.1} parent=1 // loop_footer
      %s18 = sadd.s32 1, %s14
    $region7: #{pinn_forward_fm.1} parent=1 // loop_footer_branch
      %13 = sbr.rel target = $region3
    $region8: #{pinn_forward_fm.1} parent=1 // loop_exit
      _
    %499 = vsyncpa [#allocation3], 1
    %s500 = scalar_lea.sflag [#allocation3], 1
    %501 = vsyncpa %s500, 1
    %502 = vsyncpa [#allocation5], 1
    %503 = vsyncpa [#allocation8], 1

</llo_original>
